<compile_context>
chip_gen: v7x
topology: tpu7x:2x2x1
jax: 0.10.0
libtpu: 0.0.40
codegen_flags: <defaults>
</compile_context>

<pallas_src>
import functools
import math

import jax
import jax.numpy as jnp
from jax.experimental import pallas as pl
from jax.experimental.pallas import tpu as pltpu

N_QUBITS = 8
DIM = 2 ** N_QUBITS            # 256 amplitudes
NUM_CLASSES = 2
BATCH_BLOCK = 512              # rows per grid step (sweep 512-2048 if desired)

C64 = jnp.complex64
I2 = jnp.eye(2, dtype=C64)
PAULI_X = jnp.array([[0, 1], [1, 0]], dtype=C64)
CNOT01 = jnp.array([[1, 0, 0, 0],
                    [0, 1, 0, 0],
                    [0, 0, 0, 1],
                    [0, 0, 1, 0]], dtype=C64)   # control = first (MSB) wire
CNOT10 = jnp.array([[1, 0, 0, 0],
                    [0, 0, 0, 1],
                    [0, 0, 1, 0],
                    [0, 1, 0, 0]], dtype=C64)   # control = second wire


# ----------------------------- gate builders (glue, plain JAX) -------------
def RZ(a):
    e = jnp.exp(-0.5j * a.astype(C64))
    return jnp.array([[e, 0.0], [0.0, jnp.conj(e)]], dtype=C64)


def RY(a):
    c = jnp.cos(a / 2).astype(C64)
    s = jnp.sin(a / 2).astype(C64)
    return jnp.array([[c, -s], [s, c]], dtype=C64)


def RX(a):
    c = jnp.cos(a / 2).astype(C64)
    s = (-1j * jnp.sin(a / 2)).astype(C64)
    return jnp.array([[c, s], [s, c]], dtype=C64)


def U3(theta, phi, lam):
    ct = jnp.cos(theta / 2).astype(C64)
    st = jnp.sin(theta / 2).astype(C64)
    ep = jnp.exp(1j * phi.astype(C64))
    el = jnp.exp(1j * lam.astype(C64))
    return jnp.array([[ct, -el * st], [ep * st, ep * el * ct]], dtype=C64)


def CRZ(a):  # control = first wire of the 2-qubit gate
    g = jnp.zeros((4, 4), dtype=C64)
    g = g.at[:2, :2].set(I2)
    return g.at[2:, 2:].set(RZ(a))


def CRX(a):
    g = jnp.zeros((4, 4), dtype=C64)
    g = g.at[:2, :2].set(I2)
    return g.at[2:, 2:].set(RX(a))


def conv_gate(p):  # 15-parameter two-qubit (SU(4)-style) conv block
    g = jnp.kron(U3(p[0], p[1], p[2]), U3(p[3], p[4], p[5]))
    g = CNOT01 @ g
    g = jnp.kron(RY(p[6]), RZ(p[7])) @ g
    g = CNOT10 @ g
    g = jnp.kron(RY(p[8]), I2) @ g
    g = CNOT01 @ g
    g = jnp.kron(U3(p[9], p[10], p[11]), U3(p[12], p[13], p[14])) @ g
    return g


def pool_gate(p):  # 2-parameter pooling block; wires = (control/sink, target/kept)
    g = CRZ(p[0])
    g = jnp.kron(PAULI_X, I2) @ g
    g = CRX(p[1]) @ g
    return g


def rot_gate(p):  # qml.Rot(phi, theta, omega)
    return RZ(p[2]) @ RY(p[1]) @ RZ(p[0])


def apply_gate(U, gate, wires, n):
    """Left-multiply the full n-qubit operator U by `gate` acting on `wires`.

    Wire 0 is the most-significant bit of the basis index (PennyLane order).
    """
    dim = 2 ** n
    k = len(wires)
    g = gate.reshape((2,) * (2 * k))
    T = U.reshape((2,) * n + (dim,))
    T = jnp.moveaxis(T, list(wires), list(range(k)))
    T = jnp.tensordot(g, T, axes=(list(range(k, 2 * k)), list(range(k))))
    T = jnp.moveaxis(T, list(range(k)), list(wires))
    return T.reshape(dim, dim)


def build_circuit_unitary(w_conv1, w_conv2, w_pool1, w_pool2, w_fc, n=N_QUBITS):
    U = jnp.eye(2 ** n, dtype=C64)
    # conv layer 1: nearest-neighbour ring, n gates -> weights (n, 15)
    for i in range(n):
        U = apply_gate(U, conv_gate(w_conv1[i]), (i, (i + 1) % n), n)
    # pool layer 1: pool odd wires into even wires -> weights (n/2, 2)
    for i in range(n // 2):
        U = apply_gate(U, pool_gate(w_pool1[i]), (2 * i + 1, 2 * i), n)
    # conv layer 2 on active wires {0,2,4,6} -> ceil((n-2)/2) = 3 gates
    active = list(range(0, n, 2))
    for j in range(len(active) - 1):
        U = apply_gate(U, conv_gate(w_conv2[j]), (active[j], active[j + 1]), n)
    # pool layer 2: keep wires {0, 4} -> ceil(n/4) = 2 gates
    for j, (c, t) in enumerate([(2, 0), (6, 4)]):
        U = apply_gate(U, pool_gate(w_pool2[j]), (c, t), n)
    # fc: 3-parameter Rot on wire 0
    U = apply_gate(U, rot_gate(w_fc), (0,), n)
    return U


def pauli_z_signs(wires, n=N_QUBITS):
    idx = jnp.arange(2 ** n)
    cols = []
    for w in wires:
        bit = (idx >> (n - 1 - w)) & 1
        cols.append(1.0 - 2.0 * bit.astype(jnp.float32))
    return jnp.stack(cols, axis=1)  # (2^n, len(wires))


def z_readout_diff(n=N_QUBITS, wires=(0, 4)):
    """(1, 2^n) f32 vector of (Z_{w0} - Z_{w1}) signs per basis state: {-2,0,+2}."""
    z = pauli_z_signs(list(wires), n)
    return (z[:, 0] - z[:, 1]).reshape(1, -1).astype(jnp.float32)


# ----------------------------- Pallas kernel (hot path) --------------------
def qcnn_kernel(ysign_ref, x_ref, u_ref, zd_ref, nll_ref):
    """One batch block (rows on sublanes).

    ysign_ref : (BLK, 1)   f32   2*y-1 for valid rows, 0 for padded rows
    x_ref     : (BLK, 256) bf16  raw (un-normalized) flattened input rows
    u_ref     : (256, 512) bf16  [Re(U^T) | Im(U^T)], grid-resident
    zd_ref    : (1, 256)   f32   (Z0 - Z4) sign per basis state, grid-resident
    nll_ref   : (BLK, 1)   f32   per-row NLL (0 for padded rows)
    """
    # ONE fused bf16 MXU matmul, f32 accumulation: psi = x @ [Re|Im](U^T).
    psi = jnp.dot(x_ref[...], u_ref[...], preferred_element_type=jnp.float32)
    psi_r = psi[:, :DIM]                  # lane-256 split is (8,128)-tile aligned
    psi_i = psi[:, DIM:]
    probs = psi_r * psi_r + psi_i * psi_i                     # un-normalized |psi|^2

    # AmplitudeEmbedding(normalize=True) folded into the readout: U is unitary,
    # so sum(probs) == ||x||^2 and (p0 - p1) = sum(probs * zd) / sum(probs).
    # Two full-lane reductions/row total (XLU); reciprocal on EUP is ~free.
    mass = jnp.sum(probs, axis=-1, keepdims=True)             # ||x||^2
    diff = jnp.sum(probs * zd_ref[...], axis=-1, keepdims=True)
    # eps keeps padded all-zero rows finite (masked below); a valid all-zero row
    # yields logit 0 -> loss log 2 where the NumPy reference would NaN.
    logit_diff = diff * pl.reciprocal(mass + 1e-12, approx=True)   # p0 - p1

    # 2-class CrossEntropyLoss: nll = softplus((2y-1)*(p0-p1)), stable form.
    s = ysign_ref[...]
    t = s * logit_diff
    nll = jnp.maximum(t, 0.0) + jnp.log(1.0 + jnp.exp(-jnp.abs(t)))
    nll_ref[...] = nll * jnp.abs(s)        # padded rows (s == 0) -> 0


def _round_up(v, m):
    return ((v + m - 1) // m) * m


@functools.partial(jax.jit, static_argnames=("block",))
def qcnn_forward(x, y, u_cat, zd, *, block=BATCH_BLOCK):
    """x: (B, C, H, W); y: (B,) int labels; u_cat: (DIM, 2*DIM) bf16; zd: (1, DIM)."""
    b = x.shape[0]
    rows = _round_up(max(b, 1), 8)
    blk = min(block, rows)
    if rows >= 1024:
        # Give v7x's two TensorCores at least 2 blocks once the batch is large.
        blk = min(blk, _round_up(pl.cdiv(rows, 2), 8))
    bpad = pl.cdiv(b, blk) * blk

    # Wrapper preprocessing fused under jit: reshape -> one combined pad -> bf16.
    x_flat = x.reshape(b, -1).astype(jnp.float32)   # torch.flatten(x, start_dim=1)
    feat = x_flat.shape[1]
    assert feat <= DIM, f"flattened features {feat} exceed 2**n_qubits = {DIM}"
    x_pad = jnp.pad(x_flat, ((0, bpad - b), (0, DIM - feat))).astype(jnp.bfloat16)
    # Labels as a {-1,+1} sign column; padded rows get 0 (doubles as loss mask).
    ysign = jnp.pad((2.0 * y.astype(jnp.float32) - 1.0)[:, None],
                    ((0, bpad - b), (0, 0)))

    grid = (bpad // blk,)
    nll = pl.pallas_call(
        qcnn_kernel,
        out_shape=jax.ShapeDtypeStruct((bpad, 1), jnp.float32),
        grid_spec=pltpu.PrefetchScalarGridSpec(
            num_scalar_prefetch=0,
            grid=grid,
            in_specs=[
                pl.BlockSpec((blk, 1), lambda i: (i, 0)),        # label signs
                pl.BlockSpec((blk, DIM), lambda i: (i, 0)),      # x streams (bf16)
                pl.BlockSpec((DIM, 2 * DIM), lambda i: (0, 0)),  # unitary, resident
                pl.BlockSpec((1, DIM), lambda i: (0, 0)),        # z-sign, resident
            ],
            out_specs=pl.BlockSpec((blk, 1), lambda i: (i, 0)),
        ),
        compiler_params=pltpu.CompilerParams(
            dimension_semantics=("parallel",)),                  # v7x: 2 TCs
    )(ysign, x_pad, u_cat, zd)
    # Mean over the TRUE batch size (padded rows already masked to 0 in-kernel).
    return jnp.sum(nll) * (1.0 / b)


# ----------------------------- pure-JAX reference (for sanity check) -------
def reference_loss(x, y, U):
    b = x.shape[0]
    xf = x.reshape(b, -1).astype(jnp.float32)
    if xf.shape[1] < DIM:
        xf = jnp.pad(xf, ((0, 0), (0, DIM - xf.shape[1])))
    xn = xf / jnp.linalg.norm(xf, axis=-1, keepdims=True)
    psi = xn.astype(C64) @ U.T
    probs = jnp.abs(psi) ** 2
    preds = probs @ pauli_z_signs([0, 4])                        # (B, 2)
    lse = jax.scipy.special.logsumexp(preds, axis=-1)
    p_true = jnp.take_along_axis(preds, y[:, None].astype(jnp.int32), axis=-1)[:, 0]
    return jnp.mean(lse - p_true)


# ----------------------------- driver ---------------------------------------
if __name__ == "__main__":
    key = jax.random.PRNGKey(0)
    kx, k1, k2, k3, k4, k5 = jax.random.split(key, 6)

    # Input: (B, C, H, W) = (2, 1, 16, 16) -> flattens to 256 = 2**8 amplitudes.
    x = jax.random.normal(kx, (2, 1, 16, 16), dtype=jnp.float32)
    y = jnp.array([0, 1], dtype=jnp.int32)

    two_pi = 2.0 * math.pi
    w_conv1 = jax.random.uniform(k1, (N_QUBITS, 15), minval=0.0, maxval=two_pi)
    w_conv2 = jax.random.uniform(k2, (math.ceil((N_QUBITS - 2) / 2), 15),
                                 minval=0.0, maxval=two_pi)
    w_pool1 = jax.random.uniform(k3, (math.ceil(N_QUBITS / 2), 2),
                                 minval=0.0, maxval=two_pi)
    w_pool2 = jax.random.uniform(k4, (math.ceil(N_QUBITS / 4), 2),
                                 minval=0.0, maxval=two_pi)
    w_fc = jax.random.uniform(k5, (3,), minval=0.0, maxval=two_pi)

    # Glue: fold the whole quantum circuit into one unitary, fuse real/imag parts
    # into a single (256, 512) bf16 weight matrix so psi_rows = x_rows @ [Re|Im](U^T).
    U = build_circuit_unitary(w_conv1, w_conv2, w_pool1, w_pool2, w_fc)
    Ut = U.T
    u_cat = jnp.concatenate(
        [jnp.real(Ut), jnp.imag(Ut)], axis=1).astype(jnp.bfloat16)   # (256, 512)
    zd = z_readout_diff()                                            # (1, 256)

    loss = qcnn_forward(x, y, u_cat, zd)
    loss = jax.block_until_ready(loss)

    # Sanity check against the complex64 pure-JAX reference (loose: bf16 weights).
    loss_ref = jax.block_until_ready(reference_loss(x, y, U))
    if abs(float(loss) - float(loss_ref)) > 0.05:
        raise AssertionError(
            f"kernel loss {float(loss)} deviates from reference {float(loss_ref)}")

    print("KERNEL_OK")
</pallas_src>

<mosaic_0001>
module attributes {stable_mosaic.version = 11 : i64} {
  func.func @qcnn_kernel(%arg0: i32, %arg1: memref<8x1xf32, #tpu.memory_space<vmem>>, %arg2: memref<8x256xbf16, #tpu.memory_space<vmem>>, %arg3: memref<256x512xbf16, #tpu.memory_space<vmem>>, %arg4: memref<1x256xf32, #tpu.memory_space<vmem>>, %arg5: memref<8x1xf32, #tpu.memory_space<vmem>>) attributes {dimension_semantics = [#tpu.dimension_semantics<parallel>], iteration_bounds = array<i64: 1>, scalar_prefetch = 0 : i64, scratch_operands = 0 : i64, tpu.core_type = #tpu.core_type<tc>, window_params = [{transform_indices = @transform_0, window_bounds = array<i64: 8, 1>}, {transform_indices = @transform_1, window_bounds = array<i64: 8, 256>}, {pipeline_mode = #tpu.pipeline_mode<synchronous>, transform_indices = @transform_2, window_bounds = array<i64: 256, 512>}, {pipeline_mode = #tpu.pipeline_mode<synchronous>, transform_indices = @transform_3, window_bounds = array<i64: 1, 256>}, {transform_indices = @transform_4, window_bounds = array<i64: 8, 1>}]} {
    %c0 = arith.constant 0 : index
    %c0_0 = arith.constant 0 : index
    %0 = vector.load %arg2[%c0, %c0_0] : memref<8x256xbf16, #tpu.memory_space<vmem>>, vector<8x256xbf16>
    %c0_1 = arith.constant 0 : index
    %c0_2 = arith.constant 0 : index
    %1 = vector.load %arg3[%c0_1, %c0_2] : memref<256x512xbf16, #tpu.memory_space<vmem>>, vector<256x512xbf16>
    %cst = arith.constant dense<0.000000e+00> : vector<8x512xf32>
    %2 = tpu.matmul %0, %1, %cst {dimension_numbers = #tpu.dot_dimension_numbers<[1], [0], [0], [1], [0, 0, 1, 1], [], []>} : vector<8x256xbf16>, vector<256x512xbf16>, vector<8x512xf32> -> vector<8x512xf32>
    %3 = vector.extract_strided_slice %2 {offsets = [0, 0], sizes = [8, 256], strides = [1, 1]} : vector<8x512xf32> to vector<8x256xf32>
    %4 = vector.extract_strided_slice %2 {offsets = [0, 256], sizes = [8, 256], strides = [1, 1]} : vector<8x512xf32> to vector<8x256xf32>
    %5 = arith.mulf %3, %3 : vector<8x256xf32>
    %6 = arith.mulf %4, %4 : vector<8x256xf32>
    %7 = arith.addf %5, %6 : vector<8x256xf32>
    %cst_3 = arith.constant dense<0.000000e+00> : vector<8xf32>
    %8 = vector.multi_reduction <add>, %7, %cst_3 [1] : vector<8x256xf32> to vector<8xf32>
    %9 = vector.shape_cast %8 : vector<8xf32> to vector<8x1xf32>
    %c0_4 = arith.constant 0 : index
    %c0_5 = arith.constant 0 : index
    %10 = vector.load %arg4[%c0_4, %c0_5] : memref<1x256xf32, #tpu.memory_space<vmem>>, vector<1x256xf32>
    %11 = vector.broadcast %10 : vector<1x256xf32> to vector<8x256xf32>
    %12 = arith.mulf %7, %11 : vector<8x256xf32>
    %cst_6 = arith.constant dense<0.000000e+00> : vector<8xf32>
    %13 = vector.multi_reduction <add>, %12, %cst_6 [1] : vector<8x256xf32> to vector<8xf32>
    %14 = vector.shape_cast %13 : vector<8xf32> to vector<8x1xf32>
    %cst_7 = arith.constant 9.99999996E-13 : f32
    %15 = vector.broadcast %cst_7 : f32 to vector<8x1xf32>
    %16 = arith.addf %9, %15 : vector<8x1xf32>
    %17 = tpu.reciprocal %16 {approx = true} : vector<8x1xf32> -> vector<8x1xf32>
    %18 = arith.mulf %14, %17 : vector<8x1xf32>
    %c0_8 = arith.constant 0 : index
    %c0_9 = arith.constant 0 : index
    %19 = vector.load %arg1[%c0_8, %c0_9] : memref<8x1xf32, #tpu.memory_space<vmem>>, vector<8x1xf32>
    %20 = arith.mulf %19, %18 : vector<8x1xf32>
    %cst_10 = arith.constant 0.000000e+00 : f32
    %21 = vector.broadcast %cst_10 : f32 to vector<8x1xf32>
    %22 = arith.maximumf %20, %21 : vector<8x1xf32>
    %23 = math.absf %20 : vector<8x1xf32>
    %cst_11 = arith.constant 0.000000e+00 : f32
    %24 = vector.broadcast %cst_11 : f32 to vector<8x1xf32>
    %25 = arith.subf %24, %23 : vector<8x1xf32>
    %26 = math.exp %25 : vector<8x1xf32>
    %cst_12 = arith.constant 1.000000e+00 : f32
    %27 = vector.broadcast %cst_12 : f32 to vector<8x1xf32>
    %28 = arith.addf %27, %26 : vector<8x1xf32>
    %29 = math.log %28 : vector<8x1xf32>
    %30 = arith.addf %22, %29 : vector<8x1xf32>
    %31 = math.absf %19 : vector<8x1xf32>
    %32 = arith.mulf %30, %31 : vector<8x1xf32>
    %c0_13 = arith.constant 0 : index
    %c0_14 = arith.constant 0 : index
    %33 = vector.load %arg5[%c0_13, %c0_14] : memref<8x1xf32, #tpu.memory_space<vmem>>, vector<8x1xf32>
    tpu.vector_store %arg5[%c0_13, %c0_14], %32 {strides = array<i32>} : memref<8x1xf32, #tpu.memory_space<vmem>>, vector<8x1xf32>,
    return
  }
  func.func @transform_0(%arg0: i32) -> (i32, i32) {
    %c0_i32 = arith.constant 0 : i32
    %c0_i32_0 = arith.constant 0 : i32
    return %arg0, %c0_i32 : i32, i32
  }
  func.func @transform_1(%arg0: i32) -> (i32, i32) {
    %c0_i32 = arith.constant 0 : i32
    %c0_i32_0 = arith.constant 0 : i32
    return %arg0, %c0_i32 : i32, i32
  }
  func.func @transform_2(%arg0: i32) -> (i32, i32) {
    %c0_i32 = arith.constant 0 : i32
    %c0_i32_0 = arith.constant 0 : i32
    %c0_i32_1 = arith.constant 0 : i32
    return %c0_i32, %c0_i32_0 : i32, i32
  }
  func.func @transform_3(%arg0: i32) -> (i32, i32) {
    %c0_i32 = arith.constant 0 : i32
    %c0_i32_0 = arith.constant 0 : i32
    %c0_i32_1 = arith.constant 0 : i32
    return %c0_i32, %c0_i32_0 : i32, i32
  }
  func.func @transform_4(%arg0: i32) -> (i32, i32) {
    %c0_i32 = arith.constant 0 : i32
    %c0_i32_0 = arith.constant 0 : i32
    return %arg0, %c0_i32 : i32, i32
  }
}

</mosaic_0001>

<llo_original>
// kernel: qcnn_forward.1
$region0: #{qcnn_forward.1}
  #allocation0 [shape = 'u32[]', space=smem, size = 0x4, offset = 0x4, fixed_abs, tag = 'smem constant byte address 0x4 - core index']
  #allocation1 [shape = 'u32[144,128]{1,0:T(1,128)}', space=vmem, size = 0x12000, scoped, tag = 'internal scratch']
  %s0 = inlined_call_operand.vmem [shape: f32[8,1], index: 0, kind: input, shape index: {}]
  %s1 = inlined_call_operand.vmem [shape: bf16[8,256], index: 1, kind: input, shape index: {}]
  %s2 = inlined_call_operand.hbm [shape: bf16[256,512], index: 2, kind: input, shape index: {}]
  %s3 = inlined_call_operand.vmem [shape: f32[1,256], index: 3, kind: input, shape index: {}]
  %s4 = inlined_call_operand.vmem [shape: f32[8,1], index: 4, kind: output, shape index: {}]
  %s5 = sld [smem:[#allocation0]]
  $region30: #{qcnn_forward.1} parent=0
    _
  %s7 = ssub.s32 1, %s5
  %s8 = scalar_select 0, %s7, %s5
  $region1: #{qcnn_forward.1} parent=0
    #allocation2 [shape = 'u8[262144]{0}', space=vmem, size = 0x40000, scoped, tag = 'input window, operand 2, single buffered']
    #allocation3 [shape = 's32[1]{0}', space=sflag, size = 0x4, scoped, tag = 'scoped memory for qcnn_forward.1']
    %9 = vsyncpa [#allocation3], 0
    // Predicated region
    $region2: #{qcnn_forward.1} parent=1 // pred_check
      _
    $region3: #{qcnn_forward.1} parent=1 // pred_check_branch
      %11 = sbr.rel (0) target = $region5
    $region4: #{qcnn_forward.1} parent=1 // pred_region
      _
    $region5: #{qcnn_forward.1} parent=1 // pred_fallthru
      _
    // Predicated region
    $region6: #{qcnn_forward.1} parent=1 // pred_check
      _
    $region7: #{qcnn_forward.1} parent=1 // pred_check_branch
      %13 = sbr.rel (0) target = $region9
    $region8: #{qcnn_forward.1} parent=1 // pred_region
      _
    $region9: #{qcnn_forward.1} parent=1 // pred_fallthru
      _
    // Predicated region
    $region10: #{qcnn_forward.1} parent=1 // pred_check
      _
    $region11: #{qcnn_forward.1} parent=1 // pred_check_branch
      %15 = sbr.rel (0) target = $region13
    $region12: #{qcnn_forward.1} parent=1 // pred_region
      %s17 = ssub.s32 8192, 8192
      %18 = vsyncadd [#allocation3], %s17
      %s19 = sshll.u32 [#allocation2], 4
      %s20 = int_to_ptr.vmem [resolvable:$true] %s19
      %25 = dma.hbm_to_vmem [thread:$0]  %s2, 8192, %s20, [#allocation3], 256, 256, 16
    $region13: #{qcnn_forward.1} parent=1 // pred_fallthru
      _
    // Predicated region
    $region14: #{qcnn_forward.1} parent=1 // pred_check
      _
    $region15: #{qcnn_forward.1} parent=1 // pred_check_branch
      %27 = sbr.rel (0) target = $region17
    $region16: #{qcnn_forward.1} parent=1 // pred_region
      _
    $region17: #{qcnn_forward.1} parent=1 // pred_fallthru
      _
    // Predicated region
    $region18: #{qcnn_forward.1} parent=1 // pred_check
      _
    $region19: #{qcnn_forward.1} parent=1 // pred_check_branch
      %29 = sbr.rel (0) target = $region21
    $region20: #{qcnn_forward.1} parent=1 // pred_region
      %30 = dma.done [#allocation3], 8192
    $region21: #{qcnn_forward.1} parent=1 // pred_fallthru
      _
    %v31 = vld [vmem:[%s1] sm:$0xff]
    %v32 = vld [vmem:[#allocation2] sm:$0xff]
    %v33 = vld [vmem:[#allocation2 + $0x8] sm:$0xff]
    %v34 = vld [vmem:[#allocation2 + $0x10] sm:$0xff]
    %v35 = vld [vmem:[#allocation2 + $0x18] sm:$0xff]
    %v36 = vld [vmem:[#allocation2 + $0x20] sm:$0xff]
    %v37 = vld [vmem:[#allocation2 + $0x28] sm:$0xff]
    %v38 = vld [vmem:[#allocation2 + $0x30] sm:$0xff]
    %v39 = vld [vmem:[#allocation2 + $0x38] sm:$0xff]
    %v40 = vld [vmem:[#allocation2 + $0x40] sm:$0xff]
    %v41 = vld [vmem:[#allocation2 + $0x48] sm:$0xff]
    %v42 = vld [vmem:[#allocation2 + $0x50] sm:$0xff]
    %v43 = vld [vmem:[#allocation2 + $0x58] sm:$0xff]
    %v44 = vld [vmem:[#allocation2 + $0x60] sm:$0xff]
    %v45 = vld [vmem:[#allocation2 + $0x68] sm:$0xff]
    %v46 = vld [vmem:[#allocation2 + $0x70] sm:$0xff]
    %v47 = vld [vmem:[#allocation2 + $0x78] sm:$0xff]
    %v48 = vld [vmem:[#allocation2 + $0x80] sm:$0xff]
    %v49 = vld [vmem:[#allocation2 + $0x88] sm:$0xff]
    %v50 = vld [vmem:[#allocation2 + $0x90] sm:$0xff]
    %v51 = vld [vmem:[#allocation2 + $0x98] sm:$0xff]
    %v52 = vld [vmem:[#allocation2 + $0xa0] sm:$0xff]
    %v53 = vld [vmem:[#allocation2 + $0xa8] sm:$0xff]
    %v54 = vld [vmem:[#allocation2 + $0xb0] sm:$0xff]
    %v55 = vld [vmem:[#allocation2 + $0xb8] sm:$0xff]
    %v56 = vld [vmem:[#allocation2 + $0xc0] sm:$0xff]
    %v57 = vld [vmem:[#allocation2 + $0xc8] sm:$0xff]
    %v58 = vld [vmem:[#allocation2 + $0xd0] sm:$0xff]
    %v59 = vld [vmem:[#allocation2 + $0xd8] sm:$0xff]
    %v60 = vld [vmem:[#allocation2 + $0xe0] sm:$0xff]
    %v61 = vld [vmem:[#allocation2 + $0xe8] sm:$0xff]
    %v62 = vld [vmem:[#allocation2 + $0xf0] sm:$0xff]
    %v63 = vld [vmem:[#allocation2 + $0xf8] sm:$0xff]
    %v64 = vld [vmem:[#allocation2 + $0x100] sm:$0xff]
    %v65 = vld [vmem:[#allocation2 + $0x108] sm:$0xff]
    %v66 = vld [vmem:[#allocation2 + $0x110] sm:$0xff]
    %v67 = vld [vmem:[#allocation2 + $0x118] sm:$0xff]
    %v68 = vld [vmem:[#allocation2 + $0x120] sm:$0xff]
    %v69 = vld [vmem:[#allocation2 + $0x128] sm:$0xff]
    %v70 = vld [vmem:[#allocation2 + $0x130] sm:$0xff]
    %v71 = vld [vmem:[#allocation2 + $0x138] sm:$0xff]
    %v72 = vld [vmem:[#allocation2 + $0x140] sm:$0xff]
    %v73 = vld [vmem:[#allocation2 + $0x148] sm:$0xff]
    %v74 = vld [vmem:[#allocation2 + $0x150] sm:$0xff]
    %v75 = vld [vmem:[#allocation2 + $0x158] sm:$0xff]
    %v76 = vld [vmem:[#allocation2 + $0x160] sm:$0xff]
    %v77 = vld [vmem:[#allocation2 + $0x168] sm:$0xff]
    %v78 = vld [vmem:[#allocation2 + $0x170] sm:$0xff]
    %v79 = vld [vmem:[#allocation2 + $0x178] sm:$0xff]
    %v80 = vld [vmem:[#allocation2 + $0x180] sm:$0xff]
    %v81 = vld [vmem:[#allocation2 + $0x188] sm:$0xff]
    %v82 = vld [vmem:[#allocation2 + $0x190] sm:$0xff]
    %v83 = vld [vmem:[#allocation2 + $0x198] sm:$0xff]
    %v84 = vld [vmem:[#allocation2 + $0x1a0] sm:$0xff]
    %v85 = vld [vmem:[#allocation2 + $0x1a8] sm:$0xff]
    %v86 = vld [vmem:[#allocation2 + $0x1b0] sm:$0xff]
    %v87 = vld [vmem:[#allocation2 + $0x1b8] sm:$0xff]
    %v88 = vld [vmem:[#allocation2 + $0x1c0] sm:$0xff]
    %v89 = vld [vmem:[#allocation2 + $0x1c8] sm:$0xff]
    %v90 = vld [vmem:[#allocation2 + $0x1d0] sm:$0xff]
    %v91 = vld [vmem:[#allocation2 + $0x1d8] sm:$0xff]
    %v92 = vld [vmem:[#allocation2 + $0x1e0] sm:$0xff]
    %v93 = vld [vmem:[#allocation2 + $0x1e8] sm:$0xff]
    %v94 = vld [vmem:[#allocation2 + $0x1f0] sm:$0xff]
    %v95 = vld [vmem:[#allocation2 + $0x1f8] sm:$0xff]
    %v97 = vunpack.c.l.b16 %v31
    %v98 = vunpack.c.h.b16 %v31
    %v99 = vpack.c.b16 %v97, %v97
    %v100 = vpack.c.b16 %v98, %v98
    %v167 = vunpack.c.l.b16 %v32
    %v168 = vunpack.c.h.b16 %v32
    %v169 = vunpack.c.l.b16 %v33
    %v170 = vunpack.c.h.b16 %v33
    %v171 = vunpack.c.l.b16 %v34
    %v172 = vunpack.c.h.b16 %v34
    %v173 = vunpack.c.l.b16 %v35
    %v174 = vunpack.c.h.b16 %v35
    %v175 = vunpack.c.l.b16 %v36
    %v176 = vunpack.c.h.b16 %v36
    %v177 = vunpack.c.l.b16 %v37
    %v178 = vunpack.c.h.b16 %v37
    %v179 = vunpack.c.l.b16 %v38
    %v180 = vunpack.c.h.b16 %v38
    %v181 = vunpack.c.l.b16 %v39
    %v182 = vunpack.c.h.b16 %v39
    %v183 = vunpack.c.l.b16 %v40
    %v184 = vunpack.c.h.b16 %v40
    %v185 = vunpack.c.l.b16 %v41
    %v186 = vunpack.c.h.b16 %v41
    %v187 = vunpack.c.l.b16 %v42
    %v188 = vunpack.c.h.b16 %v42
    %v189 = vunpack.c.l.b16 %v43
    %v190 = vunpack.c.h.b16 %v43
    %v191 = vunpack.c.l.b16 %v44
    %v192 = vunpack.c.h.b16 %v44
    %v193 = vunpack.c.l.b16 %v45
    %v194 = vunpack.c.h.b16 %v45
    %v195 = vunpack.c.l.b16 %v46
    %v196 = vunpack.c.h.b16 %v46
    %v197 = vunpack.c.l.b16 %v47
    %v198 = vunpack.c.h.b16 %v47
    %v199 = vunpack.c.l.b16 %v48
    %v200 = vunpack.c.h.b16 %v48
    %v201 = vunpack.c.l.b16 %v49
    %v202 = vunpack.c.h.b16 %v49
    %v203 = vunpack.c.l.b16 %v50
    %v204 = vunpack.c.h.b16 %v50
    %v205 = vunpack.c.l.b16 %v51
    %v206 = vunpack.c.h.b16 %v51
    %v207 = vunpack.c.l.b16 %v52
    %v208 = vunpack.c.h.b16 %v52
    %v209 = vunpack.c.l.b16 %v53
    %v210 = vunpack.c.h.b16 %v53
    %v211 = vunpack.c.l.b16 %v54
    %v212 = vunpack.c.h.b16 %v54
    %v213 = vunpack.c.l.b16 %v55
    %v214 = vunpack.c.h.b16 %v55
    %v215 = vunpack.c.l.b16 %v56
    %v216 = vunpack.c.h.b16 %v56
    %v217 = vunpack.c.l.b16 %v57
    %v218 = vunpack.c.h.b16 %v57
    %v219 = vunpack.c.l.b16 %v58
    %v220 = vunpack.c.h.b16 %v58
    %v221 = vunpack.c.l.b16 %v59
    %v222 = vunpack.c.h.b16 %v59
    %v223 = vunpack.c.l.b16 %v60
    %v224 = vunpack.c.h.b16 %v60
    %v225 = vunpack.c.l.b16 %v61
    %v226 = vunpack.c.h.b16 %v61
    %v227 = vunpack.c.l.b16 %v62
    %v228 = vunpack.c.h.b16 %v62
    %v229 = vunpack.c.l.b16 %v63
    %v230 = vunpack.c.h.b16 %v63
    %v231 = vunpack.c.l.b16 %v64
    %v232 = vunpack.c.h.b16 %v64
    %v233 = vunpack.c.l.b16 %v65
    %v234 = vunpack.c.h.b16 %v65
    %v235 = vunpack.c.l.b16 %v66
    %v236 = vunpack.c.h.b16 %v66
    %v237 = vunpack.c.l.b16 %v67
    %v238 = vunpack.c.h.b16 %v67
    %v239 = vunpack.c.l.b16 %v68
    %v240 = vunpack.c.h.b16 %v68
    %v241 = vunpack.c.l.b16 %v69
    %v242 = vunpack.c.h.b16 %v69
    %v243 = vunpack.c.l.b16 %v70
    %v244 = vunpack.c.h.b16 %v70
    %v245 = vunpack.c.l.b16 %v71
    %v246 = vunpack.c.h.b16 %v71
    %v247 = vunpack.c.l.b16 %v72
    %v248 = vunpack.c.h.b16 %v72
    %v249 = vunpack.c.l.b16 %v73
    %v250 = vunpack.c.h.b16 %v73
    %v251 = vunpack.c.l.b16 %v74
    %v252 = vunpack.c.h.b16 %v74
    %v253 = vunpack.c.l.b16 %v75
    %v254 = vunpack.c.h.b16 %v75
    %v255 = vunpack.c.l.b16 %v76
    %v256 = vunpack.c.h.b16 %v76
    %v257 = vunpack.c.l.b16 %v77
    %v258 = vunpack.c.h.b16 %v77
    %v259 = vunpack.c.l.b16 %v78
    %v260 = vunpack.c.h.b16 %v78
    %v261 = vunpack.c.l.b16 %v79
    %v262 = vunpack.c.h.b16 %v79
    %v263 = vunpack.c.l.b16 %v80
    %v264 = vunpack.c.h.b16 %v80
    %v265 = vunpack.c.l.b16 %v81
    %v266 = vunpack.c.h.b16 %v81
    %v267 = vunpack.c.l.b16 %v82
    %v268 = vunpack.c.h.b16 %v82
    %v269 = vunpack.c.l.b16 %v83
    %v270 = vunpack.c.h.b16 %v83
    %v271 = vunpack.c.l.b16 %v84
    %v272 = vunpack.c.h.b16 %v84
    %v273 = vunpack.c.l.b16 %v85
    %v274 = vunpack.c.h.b16 %v85
    %v275 = vunpack.c.l.b16 %v86
    %v276 = vunpack.c.h.b16 %v86
    %v277 = vunpack.c.l.b16 %v87
    %v278 = vunpack.c.h.b16 %v87
    %v279 = vunpack.c.l.b16 %v88
    %v280 = vunpack.c.h.b16 %v88
    %v281 = vunpack.c.l.b16 %v89
    %v282 = vunpack.c.h.b16 %v89
    %v283 = vunpack.c.l.b16 %v90
    %v284 = vunpack.c.h.b16 %v90
    %v285 = vunpack.c.l.b16 %v91
    %v286 = vunpack.c.h.b16 %v91
    %v287 = vunpack.c.l.b16 %v92
    %v288 = vunpack.c.h.b16 %v92
    %v289 = vunpack.c.l.b16 %v93
    %v290 = vunpack.c.h.b16 %v93
    %v291 = vunpack.c.l.b16 %v94
    %v292 = vunpack.c.h.b16 %v94
    %v293 = vunpack.c.l.b16 %v95
    %v294 = vunpack.c.h.b16 %v95
    %v295 = vpack.c.b16 %v171, %v167
    %v296 = vpack.c.b16 %v172, %v168
    %v297 = vpack.c.b16 %v173, %v169
    %v298 = vpack.c.b16 %v174, %v170
    %v299 = vpack.c.b16 %v179, %v175
    %v300 = vpack.c.b16 %v180, %v176
    %v301 = vpack.c.b16 %v181, %v177
    %v302 = vpack.c.b16 %v182, %v178
    %v303 = vpack.c.b16 %v187, %v183
    %v304 = vpack.c.b16 %v188, %v184
    %v305 = vpack.c.b16 %v189, %v185
    %v306 = vpack.c.b16 %v190, %v186
    %v307 = vpack.c.b16 %v195, %v191
    %v308 = vpack.c.b16 %v196, %v192
    %v309 = vpack.c.b16 %v197, %v193
    %v310 = vpack.c.b16 %v198, %v194
    %v311 = vpack.c.b16 %v203, %v199
    %v312 = vpack.c.b16 %v204, %v200
    %v313 = vpack.c.b16 %v205, %v201
    %v314 = vpack.c.b16 %v206, %v202
    %v315 = vpack.c.b16 %v211, %v207
    %v316 = vpack.c.b16 %v212, %v208
    %v317 = vpack.c.b16 %v213, %v209
    %v318 = vpack.c.b16 %v214, %v210
    %v319 = vpack.c.b16 %v219, %v215
    %v320 = vpack.c.b16 %v220, %v216
    %v321 = vpack.c.b16 %v221, %v217
    %v322 = vpack.c.b16 %v222, %v218
    %v323 = vpack.c.b16 %v227, %v223
    %v324 = vpack.c.b16 %v228, %v224
    %v325 = vpack.c.b16 %v229, %v225
    %v326 = vpack.c.b16 %v230, %v226
    %v327 = vpack.c.b16 %v235, %v231
    %v328 = vpack.c.b16 %v236, %v232
    %v329 = vpack.c.b16 %v237, %v233
    %v330 = vpack.c.b16 %v238, %v234
    %v331 = vpack.c.b16 %v243, %v239
    %v332 = vpack.c.b16 %v244, %v240
    %v333 = vpack.c.b16 %v245, %v241
    %v334 = vpack.c.b16 %v246, %v242
    %v335 = vpack.c.b16 %v251, %v247
    %v336 = vpack.c.b16 %v252, %v248
    %v337 = vpack.c.b16 %v253, %v249
    %v338 = vpack.c.b16 %v254, %v250
    %v339 = vpack.c.b16 %v259, %v255
    %v340 = vpack.c.b16 %v260, %v256
    %v341 = vpack.c.b16 %v261, %v257
    %v342 = vpack.c.b16 %v262, %v258
    %v343 = vpack.c.b16 %v267, %v263
    %v344 = vpack.c.b16 %v268, %v264
    %v345 = vpack.c.b16 %v269, %v265
    %v346 = vpack.c.b16 %v270, %v266
    %v347 = vpack.c.b16 %v275, %v271
    %v348 = vpack.c.b16 %v276, %v272
    %v349 = vpack.c.b16 %v277, %v273
    %v350 = vpack.c.b16 %v278, %v274
    %v351 = vpack.c.b16 %v283, %v279
    %v352 = vpack.c.b16 %v284, %v280
    %v353 = vpack.c.b16 %v285, %v281
    %v354 = vpack.c.b16 %v286, %v282
    %v355 = vpack.c.b16 %v291, %v287
    %v356 = vpack.c.b16 %v292, %v288
    %v357 = vpack.c.b16 %v293, %v289
    %v358 = vpack.c.b16 %v294, %v290
    %423 = vmatprep.subr.bf16.mxu0 %v296
    %424 = vmatpush1.bf16.msra.mxu0 %v295
    %425 = vmatprep.subr.bf16.mxu0 %v300
    %426 = vmatpush1.bf16.msra.mxu0 %v299
    %427 = vmatprep.subr.bf16.mxu0 %v304
    %428 = vmatpush1.bf16.msra.mxu0 %v303
    %429 = vmatprep.subr.bf16.mxu0 %v308
    %430 = vmatpush1.bf16.msra.mxu0 %v307
    %431 = vmatprep.subr.bf16.mxu0 %v312
    %432 = vmatpush1.bf16.msra.mxu0 %v311
    %433 = vmatprep.subr.bf16.mxu0 %v316
    %434 = vmatpush1.bf16.msra.mxu0 %v315
    %435 = vmatprep.subr.bf16.mxu0 %v320
    %436 = vmatpush1.bf16.msra.mxu0 %v319
    %437 = vmatprep.subr.bf16.mxu0 %v324
    %438 = vmatpush1.bf16.msra.mxu0 %v323
    %439 = vmatprep.subr.bf16.mxu0 %v328
    %440 = vmatpush1.bf16.msra.mxu0 %v327
    %441 = vmatprep.subr.bf16.mxu0 %v332
    %442 = vmatpush1.bf16.msra.mxu0 %v331
    %443 = vmatprep.subr.bf16.mxu0 %v336
    %444 = vmatpush1.bf16.msra.mxu0 %v335
    %445 = vmatprep.subr.bf16.mxu0 %v340
    %446 = vmatpush1.bf16.msra.mxu0 %v339
    %447 = vmatprep.subr.bf16.mxu0 %v344
    %448 = vmatpush1.bf16.msra.mxu0 %v343
    %449 = vmatprep.subr.bf16.mxu0 %v348
    %450 = vmatpush1.bf16.msra.mxu0 %v347
    %451 = vmatprep.subr.bf16.mxu0 %v352
    %452 = vmatpush1.bf16.msra.mxu0 %v351
    %453 = vmatprep.subr.bf16.mxu0 %v356
    %454 = vmatpush1.bf16.msra.mxu0 %v355
    %455 = vmatprep.mubr.bf16.mxu0 %v100
    %456 = vmatmul.mubr.bf16.gmra.mrb[0].mxu0 %v99
    %v457 = vpop.f32.mrb[0].mxu0
    %v458 = vadd.f32 0.0, %v457
    %v459 = vpop.f32.mrb[0].mxu0
    %v460 = vadd.f32 0.0, %v459
    %v461 = vpop.f32.mrb[0].mxu0
    %v462 = vpop.f32.mrb[0].mxu0
    %463 = vdwg.mxu0
    %464 = vmatprep.subr.bf16.mxu0 %v298
    %465 = vmatpush1.bf16.msra.mxu0 %v297
    %466 = vmatprep.subr.bf16.mxu0 %v302
    %467 = vmatpush1.bf16.msra.mxu0 %v301
    %468 = vmatprep.subr.bf16.mxu0 %v306
    %469 = vmatpush1.bf16.msra.mxu0 %v305
    %470 = vmatprep.subr.bf16.mxu0 %v310
    %471 = vmatpush1.bf16.msra.mxu0 %v309
    %472 = vmatprep.subr.bf16.mxu0 %v314
    %473 = vmatpush1.bf16.msra.mxu0 %v313
    %474 = vmatprep.subr.bf16.mxu0 %v318
    %475 = vmatpush1.bf16.msra.mxu0 %v317
    %476 = vmatprep.subr.bf16.mxu0 %v322
    %477 = vmatpush1.bf16.msra.mxu0 %v321
    %478 = vmatprep.subr.bf16.mxu0 %v326
    %479 = vmatpush1.bf16.msra.mxu0 %v325
    %480 = vmatprep.subr.bf16.mxu0 %v330
    %481 = vmatpush1.bf16.msra.mxu0 %v329
    %482 = vmatprep.subr.bf16.mxu0 %v334
    %483 = vmatpush1.bf16.msra.mxu0 %v333
    %484 = vmatprep.subr.bf16.mxu0 %v338
    %485 = vmatpush1.bf16.msra.mxu0 %v337
    %486 = vmatprep.subr.bf16.mxu0 %v342
    %487 = vmatpush1.bf16.msra.mxu0 %v341
    %488 = vmatprep.subr.bf16.mxu0 %v346
    %489 = vmatpush1.bf16.msra.mxu0 %v345
    %490 = vmatprep.subr.bf16.mxu0 %v350
    %491 = vmatpush1.bf16.msra.mxu0 %v349
    %492 = vmatprep.subr.bf16.mxu0 %v354
    %493 = vmatpush1.bf16.msra.mxu0 %v353
    %494 = vmatprep.subr.bf16.mxu0 %v358
    %495 = vmatpush1.bf16.msra.mxu0 %v357
    %496 = vmatprep.mubr.bf16.mxu0 %v100
    %497 = vmatmul.mubr.bf16.gmra.mrb[0].mxu0 %v99
    %v498 = vpop.f32.mrb[0].mxu0
    %v499 = vadd.f32 0.0, %v498
    %v500 = vpop.f32.mrb[0].mxu0
    %v501 = vadd.f32 0.0, %v500
    %v502 = vpop.f32.mrb[0].mxu0
    %v503 = vpop.f32.mrb[0].mxu0
    %504 = vdwg.mxu0
    %v505 = vmul.f32 %v458, %v458
    %v506 = vmul.f32 %v460, %v460
    %v507 = vmul.f32 %v499, %v499
    %v508 = vmul.f32 %v501, %v501
    %v509 = vadd.f32 %v505, %v507
    %v510 = vadd.f32 %v506, %v508
    %v511 = vadd.f32 %v509, %v510
    %512 = vadd.xlane.f32.xlu0 %v511
    %v513 = vpop.xlane.xlu0 %512
    %v514 = vld [vmem:[%s3] sm:$0x3]
    %v516 = vlaneseq
    %v517 = vshrl.u32 %v516, 7
    %v518 = vsub.s32 0, %v517
    %v519 = vrot.slane %v514, %v518
    %v520 = vlaneseq
    %v521 = vshrl.u32 %v520, 7
    %v522 = vsub.s32 1, %v521
    %v523 = vrot.slane %v514, %v522
    %v526 = vmul.f32 %v509, %v519
    %v527 = vmul.f32 %v510, %v523
    %v528 = vadd.f32 %v526, %v527
    %529 = vadd.xlane.f32.xlu0 %v528
    %v530 = vpop.xlane.xlu0 %529
    %v531 = vadd.f32 %v513, 1e-12
    %v532 = vrcp.pop %v531
    %v533 = vmul.f32 %v530, %v532
    %v534 = vld [vmem:[%s0] sm:$0xff]
    %v535 = vmul.f32 %v534, %v533
    %v536 = vmax.f32 %v535, 0.0
    %v537 = vand.u32 2147483647, %v535
    %v538 = vsub.f32 0.0, %v537
    %v539 = vmul.f32 %v538, 1.442695
    %v540 = vpow.pop %v539
    %v541 = vadd.f32 %v540, 1.0
    %v542 = vlog2.pop %v541
    %v543 = vmul.f32 %v542, 0.6931472
    %v544 = vadd.f32 %v536, %v543
    %v545 = vand.u32 2147483647, %v534
    %v546 = vmul.f32 %v544, %v545
    %vm547 = vcmask 7168
    %548 = vst.msk [vmem:[%s4] sm:$0xff] %vm547, %v546
    // Predicated region
    $region22: #{qcnn_forward.1} parent=1 // pred_check
      _
    $region23: #{qcnn_forward.1} parent=1 // pred_check_branch
      %550 = sbr.rel (0) target = $region25
    $region24: #{qcnn_forward.1} parent=1 // pred_region
      _
    $region25: #{qcnn_forward.1} parent=1 // pred_fallthru
      _
    // Predicated region
    $region26: #{qcnn_forward.1} parent=1 // pred_check
      _
    $region27: #{qcnn_forward.1} parent=1 // pred_check_branch
      %552 = sbr.rel (0) target = $region29
    $region28: #{qcnn_forward.1} parent=1 // pred_region
      _
    $region29: #{qcnn_forward.1} parent=1 // pred_fallthru
      _
    %553 = vsyncpa [#allocation3], 1

</llo_original>
